<compile_context>
chip_gen: v5e
topology: v5e:2x2
jax: 0.10.0
libtpu: 0.0.40
codegen_flags: <defaults>
</compile_context>

<pallas_src>
import jax
import jax.numpy as jnp
from jax import lax
from jax.experimental import pallas as pl
from jax.experimental.pallas import tpu as pltpu


def _conv_act_kernel(p_ref, w_ref, o_ref):
    """Lane-dense matmul + LeakyReLU(0.01) for one (batch, spatial-tile) grid point.

    p_ref : (KKCin, tile_s)  im2col patch tile, flattened spatial on the lane axis
    w_ref : (Ct, KKCin)      conv weights, columns ordered (ki, kj, cin)
    o_ref : (Ct, tile_s)     conv output tile (channels-major, flat HW on lanes)
    """
    acc = jnp.dot(w_ref[...], p_ref[...], preferred_element_type=jnp.float32)
    acc = jnp.maximum(acc, 0.01 * acc)          # LeakyReLU(0.01), f32, single VPU max
    o_ref[...] = acc.astype(o_ref.dtype)        # lane-dense (unmasked) store


def _pick_tile_s(S, max_tile=2048):
    """Largest spatial tile <= max_tile dividing S, preferring multiples of 256/128."""
    if S <= max_tile:
        return S
    cap = min(S, max_tile)
    for align in (256, 128):
        for cand in range(cap - cap % align, 0, -align):
            if S % cand == 0:
                return cand
    return S  # whole flattened dim: block covers the full axis (always legal)


def upscale_forward(x_nchw, weight_oihw, *, kernel_size, upscale,
                    tile_s=None, compute_dtype=jnp.bfloat16):
    """Forward pass matching the PyTorch Upscale module (bias=False).

    x_nchw      : (N, Cin, H, W) float32
    weight_oihw : (Cout*r*r, Cin, K, K) float32  (PyTorch Conv2d layout)
    returns     : (N, Cout, H*r, W*r) float32
    """
    N, Cin, H, W = x_nchw.shape
    K = kernel_size
    r = upscale
    Ct = weight_oihw.shape[0]                   # Cout * r * r
    Cout = Ct // (r * r)
    assert K % 2 == 1, "use odd kernel_size for symmetric 'same' padding"
    pad = (K - 1) // 2
    KKCin = K * K * Cin
    S = H * W

    if tile_s is None:
        tile_s = _pick_tile_s(S)
        # Keep >= 2 parallel grid units so both v7x TensorCores are used.
        if N * (S // tile_s) < 2 and S % 2 == 0 and (S // 2) % 128 == 0:
            tile_s = S // 2
    assert S % tile_s == 0, "tile_s must divide H*W"
    assert tile_s == S or tile_s % 128 == 0, \
        "tile_s must be a multiple of 128 or the full flattened spatial dim"

    # --- glue: im2col patch matrix built once with XLA (9x input traffic, tiny here) ---
    x_pad = jnp.pad(x_nchw, ((0, 0), (0, 0), (pad, pad), (pad, pad)))   # (N, Cin, Hp, Wp)
    taps = []
    for ki in range(K):
        for kj in range(K):
            taps.append(x_pad[:, :, ki:ki + H, kj:kj + W])              # (N, Cin, H, W)
    patches = jnp.stack(taps, axis=1)                                    # (N, K*K, Cin, H, W)
    patches = patches.reshape(N, KKCin, S).astype(compute_dtype)        # spatial on lanes
    # Weights -> (Ct, K*K*Cin), columns ordered (ki, kj, cin) to match im2col order.
    w_mat = jnp.transpose(weight_oihw, (0, 2, 3, 1)).reshape(Ct, KKCin).astype(compute_dtype)

    grid = (N, S // tile_s)
    conv_flat = pl.pallas_call(
        _conv_act_kernel,
        out_shape=jax.ShapeDtypeStruct((N, Ct, S), jnp.float32),
        grid=grid,
        in_specs=[
            pl.BlockSpec((None, KKCin, tile_s), lambda n, t: (n, 0, t)),
            pl.BlockSpec((Ct, KKCin), lambda n, t: (0, 0)),
        ],
        out_specs=pl.BlockSpec((None, Ct, tile_s), lambda n, t: (n, 0, t)),
        compiler_params=pltpu.CompilerParams(
            dimension_semantics=("parallel", "parallel")),
    )(patches, w_mat)

    # --- glue: PixelShuffle(r) with PyTorch NCHW semantics (left for XLA to fuse) ---
    # conv_flat[n, c*r*r + i*r + j, h*W + w] -> out[n, c, h*r + i, w*r + j]
    y = conv_flat.reshape(N, Cout, r, r, H, W)
    y = jnp.transpose(y, (0, 1, 4, 2, 5, 3))        # (N, Cout, H, r, W, r)
    return y.reshape(N, Cout, H * r, W * r)


def _reference(x_nchw, weight_oihw, *, kernel_size, upscale):
    """Pure-JAX reference (lax conv + LeakyReLU + PixelShuffle)."""
    r = upscale
    Ct = weight_oihw.shape[0]
    Cout = Ct // (r * r)
    N, _, H, W = x_nchw.shape
    y = lax.conv_general_dilated(
        x_nchw, weight_oihw, window_strides=(1, 1), padding="SAME",
        dimension_numbers=("NCHW", "OIHW", "NCHW"))
    y = jnp.where(y >= 0, y, 0.01 * y)
    y = y.reshape(N, Cout, r, r, H, W)
    y = jnp.transpose(y, (0, 1, 4, 2, 5, 3))
    return y.reshape(N, Cout, H * r, W * r)


if __name__ == "__main__":
    # Small shapes consistent with the module: batch=2, in_channels=4,
    # out_channels=4, spatial=16x16, kernel_size=3, upscale=2.
    N, Cin, H, W = 2, 4, 16, 16
    Cout, K, r = 4, 3, 2

    key = jax.random.PRNGKey(0)
    kx, kw = jax.random.split(key)
    x = jax.random.normal(kx, (N, Cin, H, W), dtype=jnp.float32)
    # Deterministic synthetic Conv2d weights (PyTorch OIHW layout), bias=False.
    weight = 0.1 * jax.random.normal(kw, (Cout * r * r, Cin, K, K), dtype=jnp.float32)

    ref = _reference(x, weight, kernel_size=K, upscale=r)

    # f32 path, auto tile (tile_s = H*W = 256, grid (2, 1) -> 2 parallel units).
    out_f32 = jax.block_until_ready(
        upscale_forward(x, weight, kernel_size=K, upscale=r, compute_dtype=jnp.float32))
    # f32 path, explicit spatial tiling (tile_s = 128, grid (2, 2)).
    out_f32_tiled = jax.block_until_ready(
        upscale_forward(x, weight, kernel_size=K, upscale=r,
                        tile_s=128, compute_dtype=jnp.float32))
    # bf16-input path (default), f32 accumulation.
    out_bf16 = jax.block_until_ready(
        upscale_forward(x, weight, kernel_size=K, upscale=r))

    assert out_f32.shape == (N, Cout, H * r, W * r), out_f32.shape
    assert jnp.allclose(out_f32, ref, atol=1e-4, rtol=1e-4), "f32 kernel mismatch"
    assert jnp.allclose(out_f32_tiled, ref, atol=1e-4, rtol=1e-4), "tiled f32 kernel mismatch"
    assert jnp.allclose(out_bf16, ref, atol=5e-2, rtol=5e-2), "bf16 kernel mismatch"

    print("KERNEL_OK")
</pallas_src>

<mosaic_0001>
module attributes {stable_mosaic.version = 11 : i64} {
  func.func @_conv_act_kernel(%arg0: i32, %arg1: i32, %arg2: memref<1x36x256xf32, #tpu.memory_space<vmem>>, %arg3: memref<16x36xf32, #tpu.memory_space<vmem>>, %arg4: memref<1x16x256xf32, #tpu.memory_space<vmem>>) attributes {dimension_semantics = [#tpu.dimension_semantics<parallel>, #tpu.dimension_semantics<parallel>], iteration_bounds = array<i64: 2, 1>, scalar_prefetch = 0 : i64, scratch_operands = 0 : i64, tpu.core_type = #tpu.core_type<tc>, window_params = [{transform_indices = @transform_0, window_bounds = array<i64: 1, 36, 256>}, {pipeline_mode = #tpu.pipeline_mode<synchronous>, transform_indices = @transform_1, window_bounds = array<i64: 16, 36>}, {transform_indices = @transform_2, window_bounds = array<i64: 1, 16, 256>}]} {
    %c0 = arith.constant 0 : index
    %c0_0 = arith.constant 0 : index
    %0 = vector.load %arg3[%c0, %c0_0] : memref<16x36xf32, #tpu.memory_space<vmem>>, vector<16x36xf32>
    %c0_1 = arith.constant 0 : index
    %c0_2 = arith.constant 0 : index
    %c0_3 = arith.constant 0 : index
    %1 = vector.load %arg2[%c0_1, %c0_2, %c0_3] : memref<1x36x256xf32, #tpu.memory_space<vmem>>, vector<1x36x256xf32>
    %2 = vector.shape_cast %1 : vector<1x36x256xf32> to vector<36x256xf32>
    %cst = arith.constant dense<0.000000e+00> : vector<16x256xf32>
    %3 = tpu.matmul %0, %2, %cst {dimension_numbers = #tpu.dot_dimension_numbers<[1], [0], [0], [1], [0, 0, 1, 1], [], []>} : vector<16x36xf32>, vector<36x256xf32>, vector<16x256xf32> -> vector<16x256xf32>
    %cst_4 = arith.constant 0.00999999977 : f32
    %4 = vector.broadcast %cst_4 : f32 to vector<16x256xf32>
    %5 = arith.mulf %4, %3 : vector<16x256xf32>
    %6 = arith.maximumf %3, %5 : vector<16x256xf32>
    %c0_5 = arith.constant 0 : index
    %c0_6 = arith.constant 0 : index
    %c0_7 = arith.constant 0 : index
    %7 = vector.load %arg4[%c0_5, %c0_6, %c0_7] : memref<1x16x256xf32, #tpu.memory_space<vmem>>, vector<1x16x256xf32>
    %8 = vector.shape_cast %7 : vector<1x16x256xf32> to vector<16x256xf32>
    %9 = vector.shape_cast %6 : vector<16x256xf32> to vector<1x16x256xf32>
    tpu.vector_store %arg4[%c0_5, %c0_6, %c0_7], %9 {strides = array<i32>} : memref<1x16x256xf32, #tpu.memory_space<vmem>>, vector<1x16x256xf32>,
    return
  }
  func.func @transform_0(%arg0: i32, %arg1: i32) -> (i32, i32, i32) {
    %c0_i32 = arith.constant 0 : i32
    %c0_i32_0 = arith.constant 0 : i32
    return %arg0, %c0_i32, %arg1 : i32, i32, i32
  }
  func.func @transform_1(%arg0: i32, %arg1: i32) -> (i32, i32) {
    %c0_i32 = arith.constant 0 : i32
    %c0_i32_0 = arith.constant 0 : i32
    %c0_i32_1 = arith.constant 0 : i32
    return %c0_i32, %c0_i32_0 : i32, i32
  }
  func.func @transform_2(%arg0: i32, %arg1: i32) -> (i32, i32, i32) {
    %c0_i32 = arith.constant 0 : i32
    %c0_i32_0 = arith.constant 0 : i32
    return %arg0, %c0_i32, %arg1 : i32, i32, i32
  }
}

</mosaic_0001>

<llo_original>
// kernel: tpu_custom_call.1
$region0: #{tpu_custom_call.1}
  #allocation0 [shape = 'u32[]', space=smem, size = 0x4, offset = 0x4, fixed_abs, tag = 'smem constant byte address 0x4 - core index']
  #allocation1 [shape = 'u32[72,128]{1,0:T(1,128)}', space=vmem, size = 0x9000, scoped, tag = 'internal scratch']
  %s0 = inlined_call_operand.vmem [shape: f32[2,36,256], index: 0, kind: input, shape index: {}]
  %s1 = inlined_call_operand.vmem [shape: f32[16,36], index: 1, kind: input, shape index: {}]
  %s2 = inlined_call_operand.hbm [shape: f32[2,16,256], index: 2, kind: output, shape index: {}]
  %s3 = sld [smem:[#allocation0]]
  $region41: #{tpu_custom_call.1} parent=0
    _
  %s5 = ssub.s32 1, %s3
  %s6 = scalar_select 0, %s5, %s3
  $region1: #{tpu_custom_call.1} parent=0
    #allocation2 [shape = 'u8[32768]{0}', space=vmem, size = 0x8000, scoped, tag = 'output window, operand 0']
    #allocation3 [shape = 's32[2]{0}', space=sflag, size = 0x8, scoped, tag = 'scoped memory for tpu_custom_call.1']
    %7 = vsyncpa [#allocation3], 0
    %s8 = scalar_lea.sflag [#allocation3], 1
    %9 = vsyncpa %s8, 0
    loop: start=0, step=1, limit=4
    $region2: #{tpu_custom_call.1} parent=1 // loop_pre_header
      _
    $region3: #{tpu_custom_call.1} parent=1 // loop_header
      %s11 = sphi 0, %s15
      %p12 = scmp.ge.s32.totalorder %s11, 4
      %s18 = sphi 0, %s30
      %s19 = sphi 0, %s26
      %s20 = sphi 0, %s18
      %s21 = sphi 0, %s19
      %s22 = sphi 0, %s20
      %s23 = sphi 0, %s21
      %s35 = sphi 0, %s37
      %s38 = sphi 0, %s35
      %s39 = sphi 0, %s38
      %s55 = sphi 0, %s39
      %s59 = sphi 0, %s59
      %s61 = sphi 0, %s59
      %s62 = sphi 0, %s61
      %s76 = sphi 0, %s62
      %s84 = sphi 0, %s86
      %s87 = sphi 0, %s84
      %s88 = sphi 0, %s87
      %s104 = sphi 0, %s88
    $region4: #{tpu_custom_call.1} parent=1 // loop_header_branch
      %14 = sbr.rel (%p12) target = $region8
    $region5: #{tpu_custom_call.1} parent=1 // loop_body
      %s16 = ssub.s32 %s11, 1
      %s17 = ssub.s32 %s11, 2
      %s24 = sadd.s32 1, %s19
      %p25 = scmp.ge.s32.totalorder %s24, 1
      %s26 = scalar_select %p25, 0, %s24
      %s27 = sadd.s32 1, %s18
      %s28 = scalar_select %p25, %s27, %s18
      %p29 = scmp.ge.s32.totalorder %s28, 2
      %s30 = scalar_select %p29, 0, %s28
      %s31 = ssub.s32 %s18, %s30
      %s32 = ssub.s32 %s19, %s26
      %s33 = sor.u32 %s31, %s32
      %p34 = scmp.eq.s32.totalorder %s33, 0
      %s36 = sadd.s32 %s35, 1
      %s37 = scalar_select %p34, %s35, %s36
      %p40 = pneg %p34
      %p41 = scmp.eq.s32.totalorder %s11, 1
      %p42 = por %p40, %p41
      %p43 = scmp.ne.s32.totalorder %s35, %s38
      %p44 = scmp.eq.s32.totalorder %s11, 0
      %p45 = por %p43, %p44
      %p46 = scmp.ne.s32.totalorder %s35, %s38
      %p47 = scmp.eq.s32.totalorder %s16, 1
      %p48 = por %p46, %p47
      %p49 = scmp.ne.s32.totalorder %s38, %s39
      %p50 = scmp.eq.s32.totalorder %s16, 0
      %p51 = por %p49, %p50
      %p52 = scmp.ne.s32.totalorder %s38, %s39
      %p53 = scmp.eq.s32.totalorder %s17, 1
      %p54 = por %p52, %p53
      %p56 = scmp.ne.s32.totalorder %s39, %s55
      %p57 = scmp.eq.s32.totalorder %s17, 0
      %p58 = por %p56, %p57
      %s60 = sadd.s32 %s59, 1
      %p63 = scmp.eq.s32.totalorder %s11, 1
      %p64 = scmp.ne.s32.totalorder %s59, %s61
      %p65 = scmp.eq.s32.totalorder %s11, 0
      %p66 = por %p64, %p65
      %p67 = scmp.ne.s32.totalorder %s59, %s61
      %p68 = scmp.eq.s32.totalorder %s16, 1
      %p69 = por %p67, %p68
      %p70 = scmp.ne.s32.totalorder %s61, %s62
      %p71 = scmp.eq.s32.totalorder %s16, 0
      %p72 = por %p70, %p71
      %p73 = scmp.ne.s32.totalorder %s61, %s62
      %p74 = scmp.eq.s32.totalorder %s17, 1
      %p75 = por %p73, %p74
      %p77 = scmp.ne.s32.totalorder %s62, %s76
      %p78 = scmp.eq.s32.totalorder %s17, 0
      %p79 = por %p77, %p78
      %s80 = ssub.s32 %s18, %s30
      %s81 = ssub.s32 %s19, %s26
      %s82 = sor.u32 %s80, %s81
      %p83 = scmp.eq.s32.totalorder %s82, 0
      %s85 = sadd.s32 %s84, 1
      %s86 = scalar_select %p83, %s84, %s85
      %p89 = pneg %p83
      %p90 = scmp.eq.s32.totalorder %s11, 1
      %p91 = por %p89, %p90
      %p92 = scmp.ne.s32.totalorder %s84, %s87
      %p93 = scmp.eq.s32.totalorder %s11, 0
      %p94 = por %p92, %p93
      %p95 = scmp.ne.s32.totalorder %s84, %s87
      %p96 = scmp.eq.s32.totalorder %s16, 1
      %p97 = por %p95, %p96
      %p98 = scmp.ne.s32.totalorder %s87, %s88
      %p99 = scmp.eq.s32.totalorder %s16, 0
      %p100 = por %p98, %p99
      %p101 = scmp.ne.s32.totalorder %s87, %s88
      %p102 = scmp.eq.s32.totalorder %s17, 1
      %p103 = por %p101, %p102
      %p105 = scmp.ne.s32.totalorder %s88, %s104
      %p106 = scmp.eq.s32.totalorder %s17, 0
      %p107 = por %p105, %p106
      %p108 = scmp.le.s32.totalorder 1, %s11
      %p109 = scmp.lt.s32.totalorder %s11, 3
      %p110 = pnand %p108, %p109
      %p111 = pneg %p110
      // Predicated region
      $region9: #{tpu_custom_call.1} parent=5 // pred_check
        _
      $region10: #{tpu_custom_call.1} parent=5 // pred_check_branch
        %113 = sbr.rel (%p110) target = $region12
      $region11: #{tpu_custom_call.1} parent=5 // pred_region
        %s114 = ssub.s32 %s11, 1
        // Predicated region
        $region13: #{tpu_custom_call.1} parent=11 // pred_check
          %p115 = pneg %p72
        $region14: #{tpu_custom_call.1} parent=11 // pred_check_branch
          %117 = sbr.rel (%p115) target = $region16
        $region15: #{tpu_custom_call.1} parent=11 // pred_region
          _
        $region16: #{tpu_custom_call.1} parent=11 // pred_fallthru
          _
      $region12: #{tpu_custom_call.1} parent=5 // pred_fallthru
        _
      %p118 = scmp.lt.s32.totalorder %s11, 2
      // Predicated region
      $region17: #{tpu_custom_call.1} parent=5 // pred_check
        %p119 = pneg %p118
      $region18: #{tpu_custom_call.1} parent=5 // pred_check_branch
        %121 = sbr.rel (%p119) target = $region20
      $region19: #{tpu_custom_call.1} parent=5 // pred_region
        // Predicated region
        $region21: #{tpu_custom_call.1} parent=19 // pred_check
          %p122 = pneg %p45
        $region22: #{tpu_custom_call.1} parent=19 // pred_check_branch
          %124 = sbr.rel (%p122) target = $region24
        $region23: #{tpu_custom_call.1} parent=19 // pred_region
          %s125 = smul.u32 2, %s19
          %p126 = scmp.lt.s32.totalorder %s18, 1
          %s127 = scalar_select %p126, %s18, 1
          %p128 = scmp.lt.s32.totalorder %s125, 1
          %s129 = scalar_select %p128, %s125, 1
          %s130 = smul.addr %s127, 10
          %s131 = sadd.s32 %s129, %s130
          %s132 = smul.addr %s131, 8
          %s133 = scalar_lea.vmem %s0, %s132
          %s134 = smul.u32 2, %s19
        $region24: #{tpu_custom_call.1} parent=19 // pred_fallthru
          _
      $region20: #{tpu_custom_call.1} parent=5 // pred_fallthru
        _
      %p135 = scmp.le.s32.totalorder 1, %s11
      %p136 = scmp.lt.s32.totalorder %s11, 3
      %p137 = pnand %p135, %p136
      %p138 = pneg %p137
      // Predicated region
      $region25: #{tpu_custom_call.1} parent=5 // pred_check
        _
      $region26: #{tpu_custom_call.1} parent=5 // pred_check_branch
        %140 = sbr.rel (%p137) target = $region28
      $region27: #{tpu_custom_call.1} parent=5 // pred_region
        %s141 = ssub.s32 %s11, 1
        %s142 = smul.u32 2, %s21
        %p143 = scmp.lt.s32.totalorder %s20, 1
        %s144 = scalar_select %p143, %s20, 1
        %p145 = scmp.lt.s32.totalorder %s142, 1
        %s146 = scalar_select %p145, %s142, 1
        %s147 = smul.addr %s144, 10
        %s148 = sadd.s32 %s146, %s147
        %s149 = smul.addr %s148, 8
        %s150 = scalar_lea.vmem %s0, %s149
        %p151 = pneg %p51
        %p152 = pneg %p48
        %p153 = pneg %p72
        %p154 = pneg %p69
        %p155 = pneg %p100
        %p156 = pneg %p97
        %s157 = sand.u32 %s87, 1
        %s158 = scalar_lea.sflag [#allocation3], %s157
        %s159 = sand.u32 %s87, 1
        %s160 = smul.addr %s159, 32
        %s161 = scalar_lea.vmem [#allocation2], %s160
        %s162 = smul.u32 2, %s21
        %p163 = scmp.lt.s32.totalorder %s20, 1
        %s164 = scalar_select %p163, %s20, 1
        %p165 = scmp.lt.s32.totalorder %s162, 1
        %s166 = scalar_select %p165, %s162, 1
        %s167 = smul.addr %s164, 10
        %s168 = sadd.s32 %s166, %s167
        %s169 = smul.addr %s168, 8
        %s170 = scalar_lea.vmem %s0, %s169
        %s171 = smul.u32 2, %s21
        %s172 = smul.u32 2, %s21
        %v173 = vld [vmem:[%s1] sm:$0xff]
        %v174 = vld [vmem:[%s1 + $0x8] sm:$0xff]
        %v175 = vld [vmem:[%s170] sm:$0xff]
        %v176 = vld [vmem:[%s170 + $0x8] sm:$0xff]
        %v177 = vld [vmem:[%s170 + $0x10] sm:$0xff]
        %v178 = vld [vmem:[%s170 + $0x18] sm:$0xff]
        %v179 = vld [vmem:[%s170 + $0x20] sm:$0xff]
        %v180 = vld [vmem:[%s170 + $0x28] sm:$0xff]
        %v181 = vld [vmem:[%s170 + $0x30] sm:$0xff]
        %v182 = vld [vmem:[%s170 + $0x38] sm:$0xff]
        %v183 = vld [vmem:[%s170 + $0x40] sm:$0xf]
        %v184 = vld [vmem:[%s170 + $0x48] sm:$0xf]
        %vm185 = vcmask 293888
        %v187 = vsel %vm185, %v173, 0
        %v190 = vsel %vm185, %v174, 0
        %vm192 = vcmask 1043456
        %v194 = vsel %vm192, %v183, 0
        %v197 = vsel %vm192, %v184, 0
        %199 = vmatpush.msra.mxu0 0.0
        %200 = vmatpush.msra.mxu0 0.0
        %201 = vmatpush.msra.mxu0 0.0
        %202 = vmatpush.msra.mxu0 0.0
        %203 = vmatpush.msra.mxu0 0.0
        %204 = vmatpush.msra.mxu0 0.0
        %205 = vmatpush.msra.mxu0 0.0
        %206 = vmatpush.msra.mxu0 0.0
        %207 = vmatpush.msra.mxu0 0.0
        %208 = vmatpush.msra.mxu0 0.0
        %209 = vmatpush.msra.mxu0 0.0
        %210 = vmatpush.msra.mxu0 %v194
        %211 = vmatpush.msra.mxu0 %v181
        %212 = vmatpush.msra.mxu0 %v179
        %213 = vmatpush.msra.mxu0 %v177
        %214 = vmatpush.msra.mxu0 %v175
        %215 = vmatmul.f32.gmra.mxu0 %v187
        %v216 = vpop.f32.mrf.mxu0
        %v217 = vadd.f32 0.0, %v216
        %218 = vmatmul.f32.gmra.mxu0 %v190
        %v219 = vpop.f32.mrf.mxu0
        %v220 = vadd.f32 0.0, %v219
        %221 = vdwg.mxu0
        %222 = vmatpush.msra.mxu0 0.0
        %223 = vmatpush.msra.mxu0 0.0
        %224 = vmatpush.msra.mxu0 0.0
        %225 = vmatpush.msra.mxu0 0.0
        %226 = vmatpush.msra.mxu0 0.0
        %227 = vmatpush.msra.mxu0 0.0
        %228 = vmatpush.msra.mxu0 0.0
        %229 = vmatpush.msra.mxu0 0.0
        %230 = vmatpush.msra.mxu0 0.0
        %231 = vmatpush.msra.mxu0 0.0
        %232 = vmatpush.msra.mxu0 0.0
        %233 = vmatpush.msra.mxu0 %v197
        %234 = vmatpush.msra.mxu0 %v182
        %235 = vmatpush.msra.mxu0 %v180
        %236 = vmatpush.msra.mxu0 %v178
        %237 = vmatpush.msra.mxu0 %v176
        %238 = vmatmul.f32.gmra.mxu0 %v187
        %v239 = vpop.f32.mrf.mxu0
        %v240 = vadd.f32 0.0, %v239
        %241 = vmatmul.f32.gmra.mxu0 %v190
        %v242 = vpop.f32.mrf.mxu0
        %v243 = vadd.f32 0.0, %v242
        %244 = vdwg.mxu0
        %v245 = vmul.f32 %v217, 0.01
        %v246 = vmul.f32 %v240, 0.01
        %v247 = vmul.f32 %v220, 0.01
        %v248 = vmul.f32 %v243, 0.01
        %v249 = vmax.f32 %v217, %v245
        %v250 = vmax.f32 %v240, %v246
        %v251 = vmax.f32 %v220, %v247
        %v252 = vmax.f32 %v243, %v248
        %253 = vst [vmem:[%s161] sm:$0xff] %v249
        %254 = vst [vmem:[%s161 + $0x8] sm:$0xff] %v250
        %255 = vst [vmem:[%s161 + $0x10] sm:$0xff] %v251
        %256 = vst [vmem:[%s161 + $0x18] sm:$0xff] %v252
        %s257 = sand.u32 %s87, 1
        %s258 = scalar_lea.sflag [#allocation3], %s257
        %s259 = sand.u32 %s87, 1
        %s260 = smul.addr %s259, 32
        %s261 = scalar_lea.vmem [#allocation2], %s260
        // Predicated region
        $region29: #{tpu_custom_call.1} parent=27 // pred_check
          %p262 = pneg %p97
        $region30: #{tpu_custom_call.1} parent=27 // pred_check_branch
          %264 = sbr.rel (%p262) target = $region32
        $region31: #{tpu_custom_call.1} parent=27 // pred_region
          %s265 = smul.u32 2, %s21
          %267 = vsyncadd %s258, 0
          %s268 = smul.addr %s20, 4
          %s269 = sadd.s32 %s265, %s268
          %s270 = smul.addr %s269, 8
          %s271 = scalar_lea.hbm %s2, %s270
          %s272 = sshll.u32 %s261, 4
          %s273 = int_to_ptr.vmem [resolvable:$true] %s272
          %s274 = sshll.u32 %s271, 4
          %s275 = int_to_ptr.hbm [resolvable:$true] %s274
          %280 = dma.vmem_to_hbm [thread:$0]  %s273, 512, %s275, %s258, 256, 256, 16
        $region32: #{tpu_custom_call.1} parent=27 // pred_fallthru
          _
      $region28: #{tpu_custom_call.1} parent=5 // pred_fallthru
        _
      %p281 = scmp.le.s32.totalorder 2, %s11
      // Predicated region
      $region33: #{tpu_custom_call.1} parent=5 // pred_check
        %p282 = pneg %p281
      $region34: #{tpu_custom_call.1} parent=5 // pred_check_branch
        %284 = sbr.rel (%p282) target = $region36
      $region35: #{tpu_custom_call.1} parent=5 // pred_region
        %s285 = ssub.s32 %s11, 2
        // Predicated region
        $region37: #{tpu_custom_call.1} parent=35 // pred_check
          %p286 = pneg %p103
        $region38: #{tpu_custom_call.1} parent=35 // pred_check_branch
          %288 = sbr.rel (%p286) target = $region40
        $region39: #{tpu_custom_call.1} parent=35 // pred_region
          %s289 = sand.u32 %s88, 1
          %s290 = scalar_lea.sflag [#allocation3], %s289
          %s291 = sand.u32 %s88, 1
          %s292 = smul.addr %s291, 32
          %s293 = scalar_lea.vmem [#allocation2], %s292
          %295 = dma.done %s290, 512
        $region40: #{tpu_custom_call.1} parent=35 // pred_fallthru
          _
      $region36: #{tpu_custom_call.1} parent=5 // pred_fallthru
        _
    $region6: #{tpu_custom_call.1} parent=1 // loop_footer
      %s15 = sadd.s32 1, %s11
    $region7: #{tpu_custom_call.1} parent=1 // loop_footer_branch
      %10 = sbr.rel target = $region3
    $region8: #{tpu_custom_call.1} parent=1 // loop_exit
      _
    %296 = vsyncpa [#allocation3], 1
    %s297 = scalar_lea.sflag [#allocation3], 1
    %298 = vsyncpa %s297, 1

</llo_original>
